<compile_context>
chip_gen: v7x
topology: tpu7x:2x2x1
jax: 0.10.0
libtpu: 0.0.40
codegen_flags: <defaults>
</compile_context>

<pallas_src>
import functools

import jax
import jax.numpy as jnp
from jax.experimental import pallas as pl
from jax.experimental.pallas import tpu as pltpu


def _round_up(a, m):
    return ((a + m - 1) // m) * m


def _edge_residual_kernel(nl_ref, e_ref, w1e_ref, w2_ref, b2_ref, o_ref, *,
                          alpha, fuse_out_act):
    """One edge tile, lane-dense packed layout [tile_rows, D=128].

    nl_ref : node contribution of Linear1 (xs[src] + xd[dest] + b1), packed
    e_ref  : edge_attr, packed
    w1e_ref: blockdiag(W1_edge) [D, D]
    w2_ref : blockdiag(W2)      [D, D]
    b2_ref : tiled b2           [1, D] (f32)
    """
    e = e_ref[...]
    # Linear1: node part precomputed (b1 folded in) + edge part on the MXU.
    h = nl_ref[...].astype(jnp.float32) + jnp.dot(
        e, w1e_ref[...], preferred_element_type=jnp.float32)
    # Dropout(p=0) == identity.  LeakyReLU(0.01) in f32 (v5e-safe elementwise).
    h = jnp.where(h > 0, h, jnp.float32(alpha) * h)
    # Linear2 (bf16 MXU inputs when compute_dtype is bf16, f32 accumulation).
    h = jnp.dot(h.astype(w2_ref.dtype), w2_ref[...],
                preferred_element_type=jnp.float32) + b2_ref[...]
    # Residual add; optional fused GCNBlock activation; full-128-lane store.
    out = e.astype(jnp.float32) + h
    if fuse_out_act:
        out = jnp.where(out > 0, out, jnp.float32(alpha) * out)
    o_ref[...] = out.astype(o_ref.dtype)


def edge_residual_layer(x, edge_index, edge_attr, params, *,
                        tile_rows=1024, compute_dtype=jnp.float32,
                        lrelu_alpha=0.01, fuse_output_activation=False):
    """x: [N, Hn] f32, edge_index: [2, E] int32, edge_attr: [E, He] f32.

    fuse_output_activation=True additionally applies LeakyReLU(lrelu_alpha) to
    the result (the `self.activation(edge_attr)` step of GCNBlock), fused into
    the same kernel to save one [E, He] HBM pass.
    """
    w1, b1, w2, b2 = params["w1"], params["b1"], params["w2"], params["b2"]
    src, dest = edge_index[0], edge_index[1]

    E, He = edge_attr.shape
    Hn = x.shape[-1]

    # --- split W1 so the [E, 2Hn+He] concat never hits HBM -------------------
    w1_s, w1_d, w1_e = w1[:Hn], w1[Hn:2 * Hn], w1[2 * Hn:]
    xs = x @ w1_s                                 # [N, He]  (N << E, cheap)
    xd = x @ w1_d                                 # [N, He]
    node_lin = xs[src] + xd[dest] + b1            # [E, He], single fused pass

    # --- lane-dense packing: p consecutive edges per 128-wide row ------------
    p = (128 // He) if (He <= 128 and 128 % He == 0) else 1
    D = p * He
    R = -(-E // p)                                       # packed rows needed
    tile_rows = _round_up(max(tile_rows, 8), 8)
    tr = min(tile_rows, max(8, _round_up(-(-R // 2), 8)))  # keep >= 2 grid steps
    Rp = _round_up(R, tr)
    Ep = Rp * p
    grid = (Rp // tr,)

    def pack(a):
        a = jnp.pad(a, ((0, Ep - E), (0, 0)))
        return a.reshape(Rp, D).astype(compute_dtype)

    nl_p = pack(node_lin)
    e_p = pack(edge_attr)

    eye_p = jnp.eye(p, dtype=jnp.float32)
    w1e_blk = jnp.kron(eye_p, w1_e).astype(compute_dtype)    # [D, D]
    w2_blk = jnp.kron(eye_p, w2).astype(compute_dtype)       # [D, D]
    b2_t = jnp.tile(b2, (1, p)).astype(jnp.float32)          # [1, D]

    itemsize = jnp.dtype(compute_dtype).itemsize
    cost = pl.CostEstimate(
        flops=4 * Rp * D * D,                        # two [Rp,D]@[D,D] matmuls
        transcendentals=0,
        bytes_accessed=Rp * D * (2 * itemsize + 4)   # nl + e reads, f32 out
        + 2 * D * D * itemsize + D * 4,
    )

    kernel = functools.partial(_edge_residual_kernel, alpha=lrelu_alpha,
                               fuse_out_act=fuse_output_activation)

    out_p = pl.pallas_call(
        kernel,
        out_shape=jax.ShapeDtypeStruct((Rp, D), jnp.float32),
        grid_spec=pltpu.PrefetchScalarGridSpec(
            num_scalar_prefetch=0,
            grid=grid,
            in_specs=[
                pl.BlockSpec((tr, D), lambda i: (i, 0)),    # node_lin tile
                pl.BlockSpec((tr, D), lambda i: (i, 0)),    # edge_attr tile
                pl.BlockSpec((D, D), lambda i: (0, 0)),     # blockdiag(W1_e), resident
                pl.BlockSpec((D, D), lambda i: (0, 0)),     # blockdiag(W2), resident
                pl.BlockSpec((1, D), lambda i: (0, 0)),     # b2 tiled, resident
            ],
            out_specs=pl.BlockSpec((tr, D), lambda i: (i, 0)),
        ),
        compiler_params=pltpu.CompilerParams(
            dimension_semantics=("parallel",)),
        cost_estimate=cost,
    )(nl_p, e_p, w1e_blk, w2_blk, b2_t)

    # Unpack: row-major reshape back to [Ep, He], drop the padded edges.
    return out_p.reshape(Ep, He)[:E].astype(edge_attr.dtype)


def init_params(key, node_hidden_size, edge_hidden_size):
    """Deterministic synthetic init (weights stored [in, out] so x @ W)."""
    din = 2 * node_hidden_size + edge_hidden_size
    k1, k2, k3, k4 = jax.random.split(key, 4)
    w1 = jax.random.normal(k1, (din, edge_hidden_size), jnp.float32) * 0.05
    b1 = jax.random.normal(k2, (1, edge_hidden_size), jnp.float32) * 0.05
    w2 = jax.random.normal(k3, (edge_hidden_size, edge_hidden_size),
                           jnp.float32) * 0.05
    b2 = jax.random.normal(k4, (1, edge_hidden_size), jnp.float32) * 0.05
    return {"w1": w1, "b1": b1, "w2": w2, "b2": b2}


def _reference(x, edge_index, edge_attr, params):
    src, dest = edge_index[0], edge_index[1]
    xcat = jnp.concatenate([x[src], x[dest], edge_attr], axis=-1)
    h = xcat @ params["w1"] + params["b1"]
    h = jnp.where(h > 0, h, 0.01 * h)
    h = h @ params["w2"] + params["b2"]
    return edge_attr + h


def _leaky(a, alpha=0.01):
    return jnp.where(a > 0, a, alpha * a)


def _run_case(key, num_nodes, num_edges, node_hidden_size, edge_hidden_size):
    kx, ke, ki, kp = jax.random.split(key, 4)
    x = jax.random.normal(kx, (num_nodes, node_hidden_size), jnp.float32)
    edge_attr = jax.random.normal(ke, (num_edges, edge_hidden_size),
                                  jnp.float32)
    edge_index = jax.random.randint(ki, (2, num_edges), 0, num_nodes,
                                    dtype=jnp.int32)
    params = init_params(kp, node_hidden_size, edge_hidden_size)

    ref = _reference(x, edge_index, edge_attr, params)

    # f32 path (numerically matches the PyTorch module).
    f32_fn = jax.jit(functools.partial(edge_residual_layer,
                                       compute_dtype=jnp.float32))
    out = jax.block_until_ready(f32_fn(x, edge_index, edge_attr, params))
    assert out.shape == (num_edges, edge_hidden_size)
    assert jnp.allclose(out, ref, atol=1e-4, rtol=1e-4)

    # Fused GCNBlock activation path (edge update + LeakyReLU in one kernel).
    fused_fn = jax.jit(functools.partial(edge_residual_layer,
                                         compute_dtype=jnp.float32,
                                         fuse_output_activation=True))
    out_f = jax.block_until_ready(fused_fn(x, edge_index, edge_attr, params))
    assert jnp.allclose(out_f, _leaky(ref), atol=1e-4, rtol=1e-4)

    # bf16 storage / MXU-input path (v6e/v7x bandwidth optimization; f32
    # accumulation and f32 elementwise inside the kernel).
    bf16_fn = jax.jit(functools.partial(edge_residual_layer,
                                        compute_dtype=jnp.bfloat16))
    out_bf16 = jax.block_until_ready(bf16_fn(x, edge_index, edge_attr, params))
    assert jnp.allclose(out_bf16, ref, atol=5e-2, rtol=5e-2)


if __name__ == "__main__":
    key = jax.random.PRNGKey(0)
    k_small, k_big = jax.random.split(key, 2)

    # Small case (He=32 -> 4 edges packed per 128-lane row); edge count is
    # deliberately NOT a multiple of the tile, exercising padding/unpadding.
    _run_case(k_small, num_nodes=16, num_edges=130,
              node_hidden_size=32, edge_hidden_size=32)

    # GCNNet default widths (node=256, edge=64 -> 2 edges per row, D=128) at a
    # modest edge count, exercising the multi-step grid / full-size tiles.
    _run_case(k_big, num_nodes=300, num_edges=4096,
              node_hidden_size=256, edge_hidden_size=64)

    print("KERNEL_OK")
</pallas_src>

<mosaic_0001>
module attributes {stable_mosaic.version = 11 : i64} {
  func.func @_edge_residual_kernel(%arg0: i32, %arg1: memref<24x128xf32, #tpu.memory_space<vmem>>, %arg2: memref<24x128xf32, #tpu.memory_space<vmem>>, %arg3: memref<128x128xf32, #tpu.memory_space<vmem>>, %arg4: memref<128x128xf32, #tpu.memory_space<vmem>>, %arg5: memref<1x128xf32, #tpu.memory_space<vmem>>, %arg6: memref<24x128xf32, #tpu.memory_space<vmem>>) attributes {dimension_semantics = [#tpu.dimension_semantics<parallel>], iteration_bounds = array<i64: 2>, scalar_prefetch = 0 : i64, scratch_operands = 0 : i64, tpu.core_type = #tpu.core_type<tc>, window_params = [{transform_indices = @transform_0, window_bounds = array<i64: 24, 128>}, {transform_indices = @transform_1, window_bounds = array<i64: 24, 128>}, {pipeline_mode = #tpu.pipeline_mode<synchronous>, transform_indices = @transform_2, window_bounds = array<i64: 128, 128>}, {pipeline_mode = #tpu.pipeline_mode<synchronous>, transform_indices = @transform_3, window_bounds = array<i64: 128, 128>}, {pipeline_mode = #tpu.pipeline_mode<synchronous>, transform_indices = @transform_4, window_bounds = array<i64: 1, 128>}, {transform_indices = @transform_5, window_bounds = array<i64: 24, 128>}]} {
    %c0 = arith.constant 0 : index
    %c0_0 = arith.constant 0 : index
    %0 = vector.load %arg2[%c0, %c0_0] : memref<24x128xf32, #tpu.memory_space<vmem>>, vector<24x128xf32>
    %c0_1 = arith.constant 0 : index
    %c0_2 = arith.constant 0 : index
    %1 = vector.load %arg1[%c0_1, %c0_2] : memref<24x128xf32, #tpu.memory_space<vmem>>, vector<24x128xf32>
    %c0_3 = arith.constant 0 : index
    %c0_4 = arith.constant 0 : index
    %2 = vector.load %arg3[%c0_3, %c0_4] : memref<128x128xf32, #tpu.memory_space<vmem>>, vector<128x128xf32>
    %cst = arith.constant dense<0.000000e+00> : vector<24x128xf32>
    %3 = tpu.matmul %0, %2, %cst {dimension_numbers = #tpu.dot_dimension_numbers<[1], [0], [0], [1], [0, 0, 1, 1], [], []>} : vector<24x128xf32>, vector<128x128xf32>, vector<24x128xf32> -> vector<24x128xf32>
    %4 = arith.addf %1, %3 : vector<24x128xf32>
    %cst_5 = arith.constant 0.000000e+00 : f32
    %5 = vector.broadcast %cst_5 : f32 to vector<24x128xf32>
    %6 = arith.cmpf ogt, %4, %5 : vector<24x128xf32>
    %cst_6 = arith.constant 0.00999999977 : f32
    %7 = vector.broadcast %cst_6 : f32 to vector<24x128xf32>
    %8 = arith.mulf %7, %4 : vector<24x128xf32>
    %9 = arith.select %6, %4, %8 : vector<24x128xi1>, vector<24x128xf32>
    %c0_7 = arith.constant 0 : index
    %c0_8 = arith.constant 0 : index
    %10 = vector.load %arg4[%c0_7, %c0_8] : memref<128x128xf32, #tpu.memory_space<vmem>>, vector<128x128xf32>
    %cst_9 = arith.constant dense<0.000000e+00> : vector<24x128xf32>
    %11 = tpu.matmul %9, %10, %cst_9 {dimension_numbers = #tpu.dot_dimension_numbers<[1], [0], [0], [1], [0, 0, 1, 1], [], []>} : vector<24x128xf32>, vector<128x128xf32>, vector<24x128xf32> -> vector<24x128xf32>
    %c0_10 = arith.constant 0 : index
    %c0_11 = arith.constant 0 : index
    %12 = vector.load %arg5[%c0_10, %c0_11] : memref<1x128xf32, #tpu.memory_space<vmem>>, vector<1x128xf32>
    %13 = vector.broadcast %12 : vector<1x128xf32> to vector<24x128xf32>
    %14 = arith.addf %11, %13 : vector<24x128xf32>
    %15 = arith.addf %0, %14 : vector<24x128xf32>
    %c0_12 = arith.constant 0 : index
    %c0_13 = arith.constant 0 : index
    %16 = vector.load %arg6[%c0_12, %c0_13] : memref<24x128xf32, #tpu.memory_space<vmem>>, vector<24x128xf32>
    tpu.vector_store %arg6[%c0_12, %c0_13], %15 {strides = array<i32>} : memref<24x128xf32, #tpu.memory_space<vmem>>, vector<24x128xf32>,
    return
  }
  func.func @transform_0(%arg0: i32) -> (i32, i32) {
    %c0_i32 = arith.constant 0 : i32
    %c0_i32_0 = arith.constant 0 : i32
    return %arg0, %c0_i32 : i32, i32
  }
  func.func @transform_1(%arg0: i32) -> (i32, i32) {
    %c0_i32 = arith.constant 0 : i32
    %c0_i32_0 = arith.constant 0 : i32
    return %arg0, %c0_i32 : i32, i32
  }
  func.func @transform_2(%arg0: i32) -> (i32, i32) {
    %c0_i32 = arith.constant 0 : i32
    %c0_i32_0 = arith.constant 0 : i32
    %c0_i32_1 = arith.constant 0 : i32
    return %c0_i32, %c0_i32_0 : i32, i32
  }
  func.func @transform_3(%arg0: i32) -> (i32, i32) {
    %c0_i32 = arith.constant 0 : i32
    %c0_i32_0 = arith.constant 0 : i32
    %c0_i32_1 = arith.constant 0 : i32
    return %c0_i32, %c0_i32_0 : i32, i32
  }
  func.func @transform_4(%arg0: i32) -> (i32, i32) {
    %c0_i32 = arith.constant 0 : i32
    %c0_i32_0 = arith.constant 0 : i32
    %c0_i32_1 = arith.constant 0 : i32
    return %c0_i32, %c0_i32_0 : i32, i32
  }
  func.func @transform_5(%arg0: i32) -> (i32, i32) {
    %c0_i32 = arith.constant 0 : i32
    %c0_i32_0 = arith.constant 0 : i32
    return %arg0, %c0_i32 : i32, i32
  }
}

</mosaic_0001>

<llo_original>
// kernel: edge_residual_layer.1
$region0: #{edge_residual_layer.1}
  #allocation0 [shape = 'u32[]', space=smem, size = 0x4, offset = 0x4, fixed_abs, tag = 'smem constant byte address 0x4 - core index']
  #allocation1 [shape = 'u32[144,128]{1,0:T(1,128)}', space=vmem, size = 0x12000, scoped, tag = 'internal scratch']
  %s0 = inlined_call_operand.vmem [shape: f32[48,128], index: 0, kind: input, shape index: {}]
  %s1 = inlined_call_operand.vmem [shape: f32[48,128], index: 1, kind: input, shape index: {}]
  %s2 = inlined_call_operand.vmem [shape: f32[128,128], index: 2, kind: input, shape index: {}]
  %s3 = inlined_call_operand.vmem [shape: f32[128,128], index: 3, kind: input, shape index: {}]
  %s4 = inlined_call_operand.vmem [shape: f32[1,128], index: 4, kind: input, shape index: {}]
  %s5 = inlined_call_operand.vmem [shape: f32[48,128], index: 5, kind: output, shape index: {}]
  %s6 = sld [smem:[#allocation0]]
  $region53: #{edge_residual_layer.1} parent=0
    _
  %s8 = ssub.s32 1, %s6
  %s9 = scalar_select 0, %s8, %s6
  loop: start=0, step=1, limit=4
  $region2: #{edge_residual_layer.1} parent=0 // loop_pre_header
    _
  $region3: #{edge_residual_layer.1} parent=0 // loop_header
    %s11 = sphi 0, %s15
    %p12 = scmp.ge.s32.totalorder %s11, 4
    %s21 = sphi 0, %s23
    %s24 = sphi 0, %s21
    %s25 = sphi 0, %s24
    %s41 = sphi 0, %s25
    %s47 = sphi 0, %s49
    %s50 = sphi 0, %s47
    %s51 = sphi 0, %s50
    %s67 = sphi 0, %s51
    %s71 = sphi 0, %s71
    %s73 = sphi 0, %s71
    %s74 = sphi 0, %s73
    %s88 = sphi 0, %s74
    %s92 = sphi 0, %s92
    %s94 = sphi 0, %s92
    %s95 = sphi 0, %s94
    %s109 = sphi 0, %s95
    %s113 = sphi 0, %s113
    %s115 = sphi 0, %s113
    %s116 = sphi 0, %s115
    %s130 = sphi 0, %s116
    %s136 = sphi 0, %s138
    %s139 = sphi 0, %s136
    %s140 = sphi 0, %s139
    %s156 = sphi 0, %s140
  $region4: #{edge_residual_layer.1} parent=0 // loop_header_branch
    %14 = sbr.rel (%p12) target = $region8
  $region5: #{edge_residual_layer.1} parent=0 // loop_body
    %s16 = ssub.s32 %s11, 1
    %s17 = ssub.s32 %s11, 2
    %s18 = sadd.s32 %s11, 1
    %s19 = ssub.s32 %s11, %s18
    %p20 = scmp.eq.s32.totalorder %s19, 0
    %s22 = sadd.s32 %s21, 1
    %s23 = scalar_select %p20, %s21, %s22
    %p26 = pneg %p20
    %p27 = scmp.eq.s32.totalorder %s11, 1
    %p28 = por %p26, %p27
    %p29 = scmp.ne.s32.totalorder %s21, %s24
    %p30 = scmp.eq.s32.totalorder %s11, 0
    %p31 = por %p29, %p30
    %p32 = scmp.ne.s32.totalorder %s21, %s24
    %p33 = scmp.eq.s32.totalorder %s16, 1
    %p34 = por %p32, %p33
    %p35 = scmp.ne.s32.totalorder %s24, %s25
    %p36 = scmp.eq.s32.totalorder %s16, 0
    %p37 = por %p35, %p36
    %p38 = scmp.ne.s32.totalorder %s24, %s25
    %p39 = scmp.eq.s32.totalorder %s17, 1
    %p40 = por %p38, %p39
    %p42 = scmp.ne.s32.totalorder %s25, %s41
    %p43 = scmp.eq.s32.totalorder %s17, 0
    %p44 = por %p42, %p43
    %s45 = ssub.s32 %s11, %s18
    %p46 = scmp.eq.s32.totalorder %s45, 0
    %s48 = sadd.s32 %s47, 1
    %s49 = scalar_select %p46, %s47, %s48
    %p52 = pneg %p46
    %p53 = scmp.eq.s32.totalorder %s11, 1
    %p54 = por %p52, %p53
    %p55 = scmp.ne.s32.totalorder %s47, %s50
    %p56 = scmp.eq.s32.totalorder %s11, 0
    %p57 = por %p55, %p56
    %p58 = scmp.ne.s32.totalorder %s47, %s50
    %p59 = scmp.eq.s32.totalorder %s16, 1
    %p60 = por %p58, %p59
    %p61 = scmp.ne.s32.totalorder %s50, %s51
    %p62 = scmp.eq.s32.totalorder %s16, 0
    %p63 = por %p61, %p62
    %p64 = scmp.ne.s32.totalorder %s50, %s51
    %p65 = scmp.eq.s32.totalorder %s17, 1
    %p66 = por %p64, %p65
    %p68 = scmp.ne.s32.totalorder %s51, %s67
    %p69 = scmp.eq.s32.totalorder %s17, 0
    %p70 = por %p68, %p69
    %s72 = sadd.s32 %s71, 1
    %p75 = scmp.eq.s32.totalorder %s11, 1
    %p76 = scmp.ne.s32.totalorder %s71, %s73
    %p77 = scmp.eq.s32.totalorder %s11, 0
    %p78 = por %p76, %p77
    %p79 = scmp.ne.s32.totalorder %s71, %s73
    %p80 = scmp.eq.s32.totalorder %s16, 1
    %p81 = por %p79, %p80
    %p82 = scmp.ne.s32.totalorder %s73, %s74
    %p83 = scmp.eq.s32.totalorder %s16, 0
    %p84 = por %p82, %p83
    %p85 = scmp.ne.s32.totalorder %s73, %s74
    %p86 = scmp.eq.s32.totalorder %s17, 1
    %p87 = por %p85, %p86
    %p89 = scmp.ne.s32.totalorder %s74, %s88
    %p90 = scmp.eq.s32.totalorder %s17, 0
    %p91 = por %p89, %p90
    %s93 = sadd.s32 %s92, 1
    %p96 = scmp.eq.s32.totalorder %s11, 1
    %p97 = scmp.ne.s32.totalorder %s92, %s94
    %p98 = scmp.eq.s32.totalorder %s11, 0
    %p99 = por %p97, %p98
    %p100 = scmp.ne.s32.totalorder %s92, %s94
    %p101 = scmp.eq.s32.totalorder %s16, 1
    %p102 = por %p100, %p101
    %p103 = scmp.ne.s32.totalorder %s94, %s95
    %p104 = scmp.eq.s32.totalorder %s16, 0
    %p105 = por %p103, %p104
    %p106 = scmp.ne.s32.totalorder %s94, %s95
    %p107 = scmp.eq.s32.totalorder %s17, 1
    %p108 = por %p106, %p107
    %p110 = scmp.ne.s32.totalorder %s95, %s109
    %p111 = scmp.eq.s32.totalorder %s17, 0
    %p112 = por %p110, %p111
    %s114 = sadd.s32 %s113, 1
    %p117 = scmp.eq.s32.totalorder %s11, 1
    %p118 = scmp.ne.s32.totalorder %s113, %s115
    %p119 = scmp.eq.s32.totalorder %s11, 0
    %p120 = por %p118, %p119
    %p121 = scmp.ne.s32.totalorder %s113, %s115
    %p122 = scmp.eq.s32.totalorder %s16, 1
    %p123 = por %p121, %p122
    %p124 = scmp.ne.s32.totalorder %s115, %s116
    %p125 = scmp.eq.s32.totalorder %s16, 0
    %p126 = por %p124, %p125
    %p127 = scmp.ne.s32.totalorder %s115, %s116
    %p128 = scmp.eq.s32.totalorder %s17, 1
    %p129 = por %p127, %p128
    %p131 = scmp.ne.s32.totalorder %s116, %s130
    %p132 = scmp.eq.s32.totalorder %s17, 0
    %p133 = por %p131, %p132
    %s134 = ssub.s32 %s11, %s18
    %p135 = scmp.eq.s32.totalorder %s134, 0
    %s137 = sadd.s32 %s136, 1
    %s138 = scalar_select %p135, %s136, %s137
    %p141 = pneg %p135
    %p142 = scmp.eq.s32.totalorder %s11, 1
    %p143 = por %p141, %p142
    %p144 = scmp.ne.s32.totalorder %s136, %s139
    %p145 = scmp.eq.s32.totalorder %s11, 0
    %p146 = por %p144, %p145
    %p147 = scmp.ne.s32.totalorder %s136, %s139
    %p148 = scmp.eq.s32.totalorder %s16, 1
    %p149 = por %p147, %p148
    %p150 = scmp.ne.s32.totalorder %s139, %s140
    %p151 = scmp.eq.s32.totalorder %s16, 0
    %p152 = por %p150, %p151
    %p153 = scmp.ne.s32.totalorder %s139, %s140
    %p154 = scmp.eq.s32.totalorder %s17, 1
    %p155 = por %p153, %p154
    %p157 = scmp.ne.s32.totalorder %s140, %s156
    %p158 = scmp.eq.s32.totalorder %s17, 0
    %p159 = por %p157, %p158
    %p160 = scmp.le.s32.totalorder 1, %s11
    %p161 = scmp.lt.s32.totalorder %s11, 3
    %p162 = pnand %p160, %p161
    %p163 = pneg %p162
    // Predicated region
    $region9: #{edge_residual_layer.1} parent=5 // pred_check
      _
    $region10: #{edge_residual_layer.1} parent=5 // pred_check_branch
      %165 = sbr.rel (%p162) target = $region12
    $region11: #{edge_residual_layer.1} parent=5 // pred_region
      %s166 = ssub.s32 %s11, 1
      // Predicated region
      $region13: #{edge_residual_layer.1} parent=11 // pred_check
        %p167 = pneg %p84
      $region14: #{edge_residual_layer.1} parent=11 // pred_check_branch
        %169 = sbr.rel (%p167) target = $region16
      $region15: #{edge_residual_layer.1} parent=11 // pred_region
        _
      $region16: #{edge_residual_layer.1} parent=11 // pred_fallthru
        _
      // Predicated region
      $region17: #{edge_residual_layer.1} parent=11 // pred_check
        %p170 = pneg %p105
      $region18: #{edge_residual_layer.1} parent=11 // pred_check_branch
        %172 = sbr.rel (%p170) target = $region20
      $region19: #{edge_residual_layer.1} parent=11 // pred_region
        _
      $region20: #{edge_residual_layer.1} parent=11 // pred_fallthru
        _
      // Predicated region
      $region21: #{edge_residual_layer.1} parent=11 // pred_check
        %p173 = pneg %p126
      $region22: #{edge_residual_layer.1} parent=11 // pred_check_branch
        %175 = sbr.rel (%p173) target = $region24
      $region23: #{edge_residual_layer.1} parent=11 // pred_region
        _
      $region24: #{edge_residual_layer.1} parent=11 // pred_fallthru
        _
    $region12: #{edge_residual_layer.1} parent=5 // pred_fallthru
      _
    %p176 = scmp.lt.s32.totalorder %s11, 2
    // Predicated region
    $region25: #{edge_residual_layer.1} parent=5 // pred_check
      %p177 = pneg %p176
    $region26: #{edge_residual_layer.1} parent=5 // pred_check_branch
      %179 = sbr.rel (%p177) target = $region28
    $region27: #{edge_residual_layer.1} parent=5 // pred_region
      // Predicated region
      $region29: #{edge_residual_layer.1} parent=27 // pred_check
        %p180 = pneg %p31
      $region30: #{edge_residual_layer.1} parent=27 // pred_check_branch
        %182 = sbr.rel (%p180) target = $region32
      $region31: #{edge_residual_layer.1} parent=27 // pred_region
        %s183 = smul.u32 3, %s11
        %p184 = scmp.lt.s32.totalorder %s183, 5
        %s185 = scalar_select %p184, %s183, 5
        %s186 = smul.addr %s185, 8
        %s187 = scalar_lea.vmem %s0, %s186
        %s188 = smul.u32 3, %s11
      $region32: #{edge_residual_layer.1} parent=27 // pred_fallthru
        _
      // Predicated region
      $region33: #{edge_residual_layer.1} parent=27 // pred_check
        %p189 = pneg %p57
      $region34: #{edge_residual_layer.1} parent=27 // pred_check_branch
        %191 = sbr.rel (%p189) target = $region36
      $region35: #{edge_residual_layer.1} parent=27 // pred_region
        %s192 = smul.u32 3, %s11
        %p193 = scmp.lt.s32.totalorder %s192, 5
        %s194 = scalar_select %p193, %s192, 5
        %s195 = smul.addr %s194, 8
        %s196 = scalar_lea.vmem %s1, %s195
        %s197 = smul.u32 3, %s11
      $region36: #{edge_residual_layer.1} parent=27 // pred_fallthru
        _
    $region28: #{edge_residual_layer.1} parent=5 // pred_fallthru
      _
    %p198 = scmp.le.s32.totalorder 1, %s11
    %p199 = scmp.lt.s32.totalorder %s11, 3
    %p200 = pnand %p198, %p199
    %p201 = pneg %p200
    // Predicated region
    $region37: #{edge_residual_layer.1} parent=5 // pred_check
      _
    $region38: #{edge_residual_layer.1} parent=5 // pred_check_branch
      %203 = sbr.rel (%p200) target = $region40
    $region39: #{edge_residual_layer.1} parent=5 // pred_region
      %s204 = ssub.s32 %s11, 1
      %s205 = smul.u32 3, %s16
      %p206 = scmp.lt.s32.totalorder %s205, 5
      %s207 = scalar_select %p206, %s205, 5
      %s208 = smul.addr %s207, 8
      %s209 = scalar_lea.vmem %s0, %s208
      %p210 = pneg %p37
      %p211 = pneg %p34
      %s212 = smul.u32 3, %s16
      %p213 = scmp.lt.s32.totalorder %s212, 5
      %s214 = scalar_select %p213, %s212, 5
      %s215 = smul.addr %s214, 8
      %s216 = scalar_lea.vmem %s1, %s215
      %p217 = pneg %p63
      %p218 = pneg %p60
      %p219 = pneg %p84
      %p220 = pneg %p81
      %p221 = pneg %p105
      %p222 = pneg %p102
      %p223 = pneg %p126
      %p224 = pneg %p123
      %p225 = pneg %p152
      %p226 = pneg %p149
      %s227 = smul.u32 3, %s16
      %p228 = scmp.lt.s32.totalorder %s227, 5
      %s229 = scalar_select %p228, %s227, 5
      %s230 = smul.addr %s229, 8
      %s231 = scalar_lea.vmem %s5, %s230
      %s232 = smul.u32 3, %s16
      %p233 = scmp.lt.s32.totalorder %s232, 5
      %s234 = scalar_select %p233, %s232, 5
      %s235 = smul.addr %s234, 8
      %s236 = scalar_lea.vmem %s0, %s235
      %s237 = smul.u32 3, %s16
      %s238 = smul.u32 3, %s16
      %p239 = scmp.lt.s32.totalorder %s238, 5
      %s240 = scalar_select %p239, %s238, 5
      %s241 = smul.addr %s240, 8
      %s242 = scalar_lea.vmem %s1, %s241
      %s243 = smul.u32 3, %s16
      %s244 = smul.u32 3, %s16
      %p245 = scmp.lt.s32.totalorder %s244, 5
      %s246 = scalar_select %p245, %s244, 5
      %s247 = smul.addr %s246, 8
      %s248 = scalar_lea.vmem %s5, %s247
      %s249 = smul.u32 3, %s16
      %v250 = vld [vmem:[%s242] sm:$0xff]
      %v251 = vld [vmem:[%s242 + $0x8] sm:$0xff]
      %v252 = vld [vmem:[%s242 + $0x10] sm:$0xff]
      %v253 = vld [vmem:[%s236] sm:$0xff]
      %v254 = vld [vmem:[%s236 + $0x8] sm:$0xff]
      %v255 = vld [vmem:[%s236 + $0x10] sm:$0xff]
      %v256 = vld [vmem:[%s2] sm:$0xff]
      %v257 = vld [vmem:[%s2 + $0x8] sm:$0xff]
      %v258 = vld [vmem:[%s2 + $0x10] sm:$0xff]
      %v259 = vld [vmem:[%s2 + $0x18] sm:$0xff]
      %v260 = vld [vmem:[%s2 + $0x20] sm:$0xff]
      %v261 = vld [vmem:[%s2 + $0x28] sm:$0xff]
      %v262 = vld [vmem:[%s2 + $0x30] sm:$0xff]
      %v263 = vld [vmem:[%s2 + $0x38] sm:$0xff]
      %v264 = vld [vmem:[%s2 + $0x40] sm:$0xff]
      %v265 = vld [vmem:[%s2 + $0x48] sm:$0xff]
      %v266 = vld [vmem:[%s2 + $0x50] sm:$0xff]
      %v267 = vld [vmem:[%s2 + $0x58] sm:$0xff]
      %v268 = vld [vmem:[%s2 + $0x60] sm:$0xff]
      %v269 = vld [vmem:[%s2 + $0x68] sm:$0xff]
      %v270 = vld [vmem:[%s2 + $0x70] sm:$0xff]
      %v271 = vld [vmem:[%s2 + $0x78] sm:$0xff]
      %272 = vmatprep.subr.mxu0 0.0
      %273 = vmatpush1.msra.mxu0 %v256
      %274 = vmatprep.subr.mxu0 0.0
      %275 = vmatpush1.msra.mxu0 %v257
      %276 = vmatprep.subr.mxu0 0.0
      %277 = vmatpush1.msra.mxu0 %v258
      %278 = vmatprep.subr.mxu0 0.0
      %279 = vmatpush1.msra.mxu0 %v259
      %280 = vmatprep.subr.mxu0 0.0
      %281 = vmatpush1.msra.mxu0 %v260
      %282 = vmatprep.subr.mxu0 0.0
      %283 = vmatpush1.msra.mxu0 %v261
      %284 = vmatprep.subr.mxu0 0.0
      %285 = vmatpush1.msra.mxu0 %v262
      %286 = vmatprep.subr.mxu0 0.0
      %287 = vmatpush1.msra.mxu0 %v263
      %288 = vmatprep.subr.mxu0 0.0
      %289 = vmatpush1.msra.mxu0 %v264
      %290 = vmatprep.subr.mxu0 0.0
      %291 = vmatpush1.msra.mxu0 %v265
      %292 = vmatprep.subr.mxu0 0.0
      %293 = vmatpush1.msra.mxu0 %v266
      %294 = vmatprep.subr.mxu0 0.0
      %295 = vmatpush1.msra.mxu0 %v267
      %296 = vmatprep.subr.mxu0 0.0
      %297 = vmatpush1.msra.mxu0 %v268
      %298 = vmatprep.subr.mxu0 0.0
      %299 = vmatpush1.msra.mxu0 %v269
      %300 = vmatprep.subr.mxu0 0.0
      %301 = vmatpush1.msra.mxu0 %v270
      %302 = vmatprep.subr.mxu0 0.0
      %303 = vmatpush1.msra.mxu0 %v271
      %304 = vmatprep.subr.mxu0 0.0
      %305 = vmatpush1.msra.mxu0 0.0
      %306 = vmatprep.subr.mxu0 0.0
      %307 = vmatpush1.msra.mxu0 0.0
      %308 = vmatprep.subr.mxu0 0.0
      %309 = vmatpush1.msra.mxu0 0.0
      %310 = vmatprep.subr.mxu0 0.0
      %311 = vmatpush1.msra.mxu0 0.0
      %312 = vmatprep.subr.mxu0 0.0
      %313 = vmatpush1.msra.mxu0 0.0
      %314 = vmatprep.subr.mxu0 0.0
      %315 = vmatpush1.msra.mxu0 0.0
      %316 = vmatprep.subr.mxu0 0.0
      %317 = vmatpush1.msra.mxu0 0.0
      %318 = vmatprep.subr.mxu0 0.0
      %319 = vmatpush1.msra.mxu0 0.0
      %320 = vmatprep.subr.mxu0 0.0
      %321 = vmatpush1.msra.mxu0 0.0
      %322 = vmatprep.subr.mxu0 0.0
      %323 = vmatpush1.msra.mxu0 0.0
      %324 = vmatprep.subr.mxu0 0.0
      %325 = vmatpush1.msra.mxu0 0.0
      %326 = vmatprep.subr.mxu0 0.0
      %327 = vmatpush1.msra.mxu0 0.0
      %328 = vmatprep.subr.mxu0 0.0
      %329 = vmatpush1.msra.mxu0 0.0
      %330 = vmatprep.subr.mxu0 0.0
      %331 = vmatpush1.msra.mxu0 0.0
      %332 = vmatprep.subr.mxu0 0.0
      %333 = vmatpush1.msra.mxu0 0.0
      %334 = vmatprep.subr.mxu0 0.0
      %335 = vmatpush1.msra.mxu0 0.0
      %336 = vmatprep.mubr.f32.mxu0 0.0
      %337 = vmatmul.mubr.f32.gmra.mrb[0].mxu0 %v250
      %v338 = vpop.f32.mrb[0].mxu0
      %v339 = vadd.f32 0.0, %v338
      %v340 = vpop.f32.mrb[0].mxu0
      %341 = vmatprep.mubr.f32.mxu0 0.0
      %342 = vmatmul.mubr.f32.gmra.mrb[0].mxu0 %v251
      %v343 = vpop.f32.mrb[0].mxu0
      %v344 = vadd.f32 0.0, %v343
      %v345 = vpop.f32.mrb[0].mxu0
      %346 = vmatprep.mubr.f32.mxu0 0.0
      %347 = vmatmul.mubr.f32.gmra.mrb[0].mxu0 %v252
      %v348 = vpop.f32.mrb[0].mxu0
      %v349 = vadd.f32 0.0, %v348
      %v350 = vpop.f32.mrb[0].mxu0
      %351 = vdwg.mxu0
      %v352 = vadd.f32 %v253, %v339
      %v353 = vadd.f32 %v254, %v344
      %v354 = vadd.f32 %v255, %v349
      %vm355 = vcmp.gt.f32.partialorder %v352, 0.0
      %vm356 = vcmp.gt.f32.partialorder %v353, 0.0
      %vm357 = vcmp.gt.f32.partialorder %v354, 0.0
      %v358 = vmul.f32 %v352, 0.01
      %v359 = vmul.f32 %v353, 0.01
      %v360 = vmul.f32 %v354, 0.01
      %v361 = vsel %vm355, %v352, %v358
      %v362 = vsel %vm356, %v353, %v359
      %v363 = vsel %vm357, %v354, %v360
      %v364 = vld [vmem:[%s3] sm:$0xff]
      %v365 = vld [vmem:[%s3 + $0x8] sm:$0xff]
      %v366 = vld [vmem:[%s3 + $0x10] sm:$0xff]
      %v367 = vld [vmem:[%s3 + $0x18] sm:$0xff]
      %v368 = vld [vmem:[%s3 + $0x20] sm:$0xff]
      %v369 = vld [vmem:[%s3 + $0x28] sm:$0xff]
      %v370 = vld [vmem:[%s3 + $0x30] sm:$0xff]
      %v371 = vld [vmem:[%s3 + $0x38] sm:$0xff]
      %v372 = vld [vmem:[%s3 + $0x40] sm:$0xff]
      %v373 = vld [vmem:[%s3 + $0x48] sm:$0xff]
      %v374 = vld [vmem:[%s3 + $0x50] sm:$0xff]
      %v375 = vld [vmem:[%s3 + $0x58] sm:$0xff]
      %v376 = vld [vmem:[%s3 + $0x60] sm:$0xff]
      %v377 = vld [vmem:[%s3 + $0x68] sm:$0xff]
      %v378 = vld [vmem:[%s3 + $0x70] sm:$0xff]
      %v379 = vld [vmem:[%s3 + $0x78] sm:$0xff]
      %v380 = vld [vmem:[%s4] sm:$0x1]
      %v382 = vlaneseq
      %v383 = vshrl.u32 %v382, 7
      %v384 = vsub.s32 0, %v383
      %v385 = vrot.slane %v380, %v384
      %387 = vmatprep.subr.mxu0 0.0
      %388 = vmatpush1.msra.mxu0 %v364
      %389 = vmatprep.subr.mxu0 0.0
      %390 = vmatpush1.msra.mxu0 %v365
      %391 = vmatprep.subr.mxu0 0.0
      %392 = vmatpush1.msra.mxu0 %v366
      %393 = vmatprep.subr.mxu0 0.0
      %394 = vmatpush1.msra.mxu0 %v367
      %395 = vmatprep.subr.mxu0 0.0
      %396 = vmatpush1.msra.mxu0 %v368
      %397 = vmatprep.subr.mxu0 0.0
      %398 = vmatpush1.msra.mxu0 %v369
      %399 = vmatprep.subr.mxu0 0.0
      %400 = vmatpush1.msra.mxu0 %v370
      %401 = vmatprep.subr.mxu0 0.0
      %402 = vmatpush1.msra.mxu0 %v371
      %403 = vmatprep.subr.mxu0 0.0
      %404 = vmatpush1.msra.mxu0 %v372
      %405 = vmatprep.subr.mxu0 0.0
      %406 = vmatpush1.msra.mxu0 %v373
      %407 = vmatprep.subr.mxu0 0.0
      %408 = vmatpush1.msra.mxu0 %v374
      %409 = vmatprep.subr.mxu0 0.0
      %410 = vmatpush1.msra.mxu0 %v375
      %411 = vmatprep.subr.mxu0 0.0
      %412 = vmatpush1.msra.mxu0 %v376
      %413 = vmatprep.subr.mxu0 0.0
      %414 = vmatpush1.msra.mxu0 %v377
      %415 = vmatprep.subr.mxu0 0.0
      %416 = vmatpush1.msra.mxu0 %v378
      %417 = vmatprep.subr.mxu0 0.0
      %418 = vmatpush1.msra.mxu0 %v379
      %419 = vmatprep.subr.mxu0 0.0
      %420 = vmatpush1.msra.mxu0 0.0
      %421 = vmatprep.subr.mxu0 0.0
      %422 = vmatpush1.msra.mxu0 0.0
      %423 = vmatprep.subr.mxu0 0.0
      %424 = vmatpush1.msra.mxu0 0.0
      %425 = vmatprep.subr.mxu0 0.0
      %426 = vmatpush1.msra.mxu0 0.0
      %427 = vmatprep.subr.mxu0 0.0
      %428 = vmatpush1.msra.mxu0 0.0
      %429 = vmatprep.subr.mxu0 0.0
      %430 = vmatpush1.msra.mxu0 0.0
      %431 = vmatprep.subr.mxu0 0.0
      %432 = vmatpush1.msra.mxu0 0.0
      %433 = vmatprep.subr.mxu0 0.0
      %434 = vmatpush1.msra.mxu0 0.0
      %435 = vmatprep.subr.mxu0 0.0
      %436 = vmatpush1.msra.mxu0 0.0
      %437 = vmatprep.subr.mxu0 0.0
      %438 = vmatpush1.msra.mxu0 0.0
      %439 = vmatprep.subr.mxu0 0.0
      %440 = vmatpush1.msra.mxu0 0.0
      %441 = vmatprep.subr.mxu0 0.0
      %442 = vmatpush1.msra.mxu0 0.0
      %443 = vmatprep.subr.mxu0 0.0
      %444 = vmatpush1.msra.mxu0 0.0
      %445 = vmatprep.subr.mxu0 0.0
      %446 = vmatpush1.msra.mxu0 0.0
      %447 = vmatprep.subr.mxu0 0.0
      %448 = vmatpush1.msra.mxu0 0.0
      %449 = vmatprep.subr.mxu0 0.0
      %450 = vmatpush1.msra.mxu0 0.0
      %451 = vmatprep.mubr.f32.mxu0 0.0
      %452 = vmatmul.mubr.f32.gmra.mrb[0].mxu0 %v361
      %v453 = vpop.f32.mrb[0].mxu0
      %v454 = vadd.f32 %v385, %v453
      %v455 = vpop.f32.mrb[0].mxu0
      %456 = vmatprep.mubr.f32.mxu0 0.0
      %457 = vmatmul.mubr.f32.gmra.mrb[0].mxu0 %v362
      %v458 = vpop.f32.mrb[0].mxu0
      %v459 = vadd.f32 %v385, %v458
      %v460 = vpop.f32.mrb[0].mxu0
      %461 = vmatprep.mubr.f32.mxu0 0.0
      %462 = vmatmul.mubr.f32.gmra.mrb[0].mxu0 %v363
      %v463 = vpop.f32.mrb[0].mxu0
      %v464 = vadd.f32 %v385, %v463
      %v465 = vpop.f32.mrb[0].mxu0
      %466 = vdwg.mxu0
      %v467 = vadd.f32 %v250, %v454
      %v468 = vadd.f32 %v251, %v459
      %v469 = vadd.f32 %v252, %v464
      %470 = vst [vmem:[%s248] sm:$0xff] %v467
      %471 = vst [vmem:[%s248 + $0x8] sm:$0xff] %v468
      %472 = vst [vmem:[%s248 + $0x10] sm:$0xff] %v469
      %s473 = smul.u32 3, %s16
      %p474 = scmp.lt.s32.totalorder %s473, 5
      %s475 = scalar_select %p474, %s473, 5
      %s476 = smul.addr %s475, 8
      %s477 = scalar_lea.vmem %s5, %s476
      // Predicated region
      $region41: #{edge_residual_layer.1} parent=39 // pred_check
        %p478 = pneg %p149
      $region42: #{edge_residual_layer.1} parent=39 // pred_check_branch
        %480 = sbr.rel (%p478) target = $region44
      $region43: #{edge_residual_layer.1} parent=39 // pred_region
        %s481 = smul.u32 3, %s16
      $region44: #{edge_residual_layer.1} parent=39 // pred_fallthru
        _
    $region40: #{edge_residual_layer.1} parent=5 // pred_fallthru
      _
    %p482 = scmp.le.s32.totalorder 2, %s11
    // Predicated region
    $region45: #{edge_residual_layer.1} parent=5 // pred_check
      %p483 = pneg %p482
    $region46: #{edge_residual_layer.1} parent=5 // pred_check_branch
      %485 = sbr.rel (%p483) target = $region48
    $region47: #{edge_residual_layer.1} parent=5 // pred_region
      %s486 = ssub.s32 %s11, 2
      // Predicated region
      $region49: #{edge_residual_layer.1} parent=47 // pred_check
        %p487 = pneg %p155
      $region50: #{edge_residual_layer.1} parent=47 // pred_check_branch
        %489 = sbr.rel (%p487) target = $region52
      $region51: #{edge_residual_layer.1} parent=47 // pred_region
        %s490 = smul.u32 3, %s17
        %p491 = scmp.lt.s32.totalorder %s490, 5
        %s492 = scalar_select %p491, %s490, 5
        %s493 = smul.addr %s492, 8
        %s494 = scalar_lea.vmem %s5, %s493
      $region52: #{edge_residual_layer.1} parent=47 // pred_fallthru
        _
    $region48: #{edge_residual_layer.1} parent=5 // pred_fallthru
      _
  $region6: #{edge_residual_layer.1} parent=0 // loop_footer
    %s15 = sadd.s32 1, %s11
  $region7: #{edge_residual_layer.1} parent=0 // loop_footer_branch
    %10 = sbr.rel target = $region3
  $region8: #{edge_residual_layer.1} parent=0 // loop_exit
    _

</llo_original>
